<compile_context>
chip_gen: v7x
topology: tpu7x:2x2x1
jax: 0.10.0
libtpu: 0.0.40
codegen_flags: <defaults>
</compile_context>

<pallas_src>
import jax
import jax.numpy as jnp
from jax.experimental import pallas as pl
from jax.experimental.pallas import tpu as pltpu

LANES = 128


def _round_up(x, m):
    return ((x + m - 1) // m) * m


def _default_tile_rows():
    try:
        kind = jax.devices()[0].device_kind.lower()
    except Exception:
        kind = ""
    # v7x: ~3.2 TB/s HBM per TC -> bigger blocks to amortize per-step overhead
    # (16 MiB double-buffered still well under its 32 MiB default scoped VMEM).
    if "v7" in kind or "7x" in kind:
        return 4096
    # v5e/v6e: 2048 rows -> ~8 MiB double-buffered, fits v5e's 16 MiB default.
    return 2048


def torus_sdf_kernel(center_ref, radii_ref, pts_ref, out_ref):
    # center_ref: SMEM (3,) f32 ; radii_ref: SMEM (2,) f32
    # pts_ref:    VMEM (3, tile_rows, 128) f32   (x/y/z planes, lane-dense)
    # out_ref:    VMEM (tile_rows, 128) f32      (lane-dense -> unmasked vst)
    cx = center_ref[0]
    cy = center_ref[1]
    cz = center_ref[2]
    R = radii_ref[0]   # major radius
    r = radii_ref[1]   # minor radius

    dx = pts_ref[0] - cx          # (tile_rows, 128) dense vregs
    dy = pts_ref[1] - cy
    dz = pts_ref[2] - cz

    ring = jnp.sqrt(dx * dx + dy * dy) - R
    out_ref[...] = jnp.sqrt(ring * ring + dz * dz) - r


def _torus_sdf_padded(pts_soa, n, center, radii, *, tile_rows, min_steps):
    """pts_soa: (3, n) f32 SoA points. Returns padded (rows_pad, 128) SDF."""
    if tile_rows is None:
        tile_rows = _default_tile_rows()
    rows = pl.cdiv(n, LANES)

    # Split rows into >= min_steps roughly-equal blocks (megacore sharding on
    # v7x + per-step overhead amortization elsewhere), capping the per-step
    # block at tile_rows and keeping ragged-N padding waste <= 8 rows/step.
    steps = max(min_steps, pl.cdiv(rows, tile_rows))
    tile_rows_eff = min(tile_rows, max(8, _round_up(pl.cdiv(rows, steps), 8)))
    grid_steps = pl.cdiv(rows, tile_rows_eff)
    rows_pad = grid_steps * tile_rows_eff
    n_pad = rows_pad * LANES

    if n_pad != n:
        # Zero-padded tail lanes compute finite garbage; sliced off by caller.
        pts_soa = jnp.pad(pts_soa, ((0, 0), (0, n_pad - n)))
    pts_soa = pts_soa.reshape(3, rows_pad, LANES)

    center_flat = center.astype(jnp.float32).reshape(3)
    radii_flat = radii.astype(jnp.float32).reshape(2)

    return pl.pallas_call(
        torus_sdf_kernel,
        out_shape=jax.ShapeDtypeStruct((rows_pad, LANES), jnp.float32),
        grid_spec=pltpu.PrefetchScalarGridSpec(
            num_scalar_prefetch=0,
            grid=(grid_steps,),
            in_specs=[
                pl.BlockSpec(memory_space=pltpu.MemorySpace.SMEM),   # center (3,)
                pl.BlockSpec(memory_space=pltpu.MemorySpace.SMEM),   # radii  (2,)
                pl.BlockSpec((3, tile_rows_eff, LANES),
                             lambda i: (0, i, 0)),                    # points
            ],
            out_specs=pl.BlockSpec((tile_rows_eff, LANES), lambda i: (i, 0)),
        ),
        compiler_params=pltpu.CompilerParams(
            dimension_semantics=("parallel",),
        ),
        cost_estimate=pl.CostEstimate(
            flops=11 * n_pad, transcendentals=2 * n_pad,
            bytes_accessed=16 * n_pad),
    )(center_flat, radii_flat, pts_soa)


def torus_sdf_from_soa(pts_soa, center, radii, *, tile_rows=None, min_steps=4):
    """Preferred entry: producer already emits SoA points of shape (3, N)."""
    pts_soa = pts_soa.astype(jnp.float32)
    n = pts_soa.shape[1]
    out = _torus_sdf_padded(pts_soa, n, center, radii,
                            tile_rows=tile_rows, min_steps=min_steps)
    return out.reshape(-1)[:n].reshape(n, 1)


def torus_sdf(points, center, radii, *, tile_rows=None, min_steps=4,
              min_kernel_points=1024):
    """points: any shape (..., 3); center: (1,3); radii: (1,2) -> (N, 1) f32."""
    pts = points.reshape(-1, 3).astype(jnp.float32)
    n = pts.shape[0]
    center = center.astype(jnp.float32).reshape(1, 3)
    radii = radii.astype(jnp.float32).reshape(1, 2)

    # Tiny point clouds: fixed pallas_call overhead dominates -> pure jnp.
    if n < min_kernel_points:
        diff = pts - center
        ring = jnp.sqrt(diff[:, 0] ** 2 + diff[:, 1] ** 2) - radii[0, 0]
        return (jnp.sqrt(ring * ring + diff[:, 2] ** 2) - radii[0, 1])[:, None]

    # Explicit AoS (N,3) -> SoA (3,N) transpose: one contiguous, full-bandwidth
    # XLA pass.  (Producers that can emit SoA directly should call
    # torus_sdf_from_soa() and skip this pass; that is the preferred layout.)
    pts_soa = pts.T
    out = _torus_sdf_padded(pts_soa, n, center, radii,
                            tile_rows=tile_rows, min_steps=min_steps)
    # TODO(synk): callers that can consume the padded (rows_pad, 128) buffer
    # directly should do so; this final slice/reshape is an extra ~4 B/point
    # pass kept only to match the module's (N, 1) output contract.
    return out.reshape(-1)[:n].reshape(n, 1)


def torus_sdf_ref(points, center, radii):
    pts = points.reshape(-1, 3).astype(jnp.float32)
    diff = pts - center
    ring = jnp.linalg.norm(diff[..., :2], axis=-1) - radii[..., 0]
    q = jnp.stack([ring, diff[..., -1]], axis=-1)
    return (jnp.linalg.norm(q, axis=-1) - radii[..., 1])[..., None]


if __name__ == "__main__":
    key = jax.random.PRNGKey(0)

    # Deterministic "cfg" parameters (shapes per module __init__: unsqueeze(0)).
    center = jnp.array([[0.1, -0.2, 0.3]], dtype=jnp.float32)   # (1, 3)
    radii = jnp.array([[0.5, 0.2]], dtype=jnp.float32)          # (1, 2)  [R, r]

    k1, k2, k3 = jax.random.split(key, 3)

    # 1) Main kernel test: 8192 points -> grid of 4 blocks (megacore-splittable).
    points = jax.random.normal(k1, (4, 2048, 3), dtype=jnp.float32)
    out = jax.block_until_ready(torus_sdf(points, center, radii))
    ref = torus_sdf_ref(points, center, radii)
    assert out.shape == (8192, 1)
    assert jnp.allclose(out, ref, atol=1e-5, rtol=1e-5)

    # 2) Multi-step grid + ragged tail: 5000 points, tile_rows=8 -> grid=(5,).
    points2 = jax.random.normal(k2, (5000, 3), dtype=jnp.float32)
    out2 = jax.block_until_ready(
        torus_sdf(points2, center, radii, tile_rows=8, min_kernel_points=0))
    ref2 = torus_sdf_ref(points2, center, radii)
    assert out2.shape == (5000, 1)
    assert jnp.allclose(out2, ref2, atol=1e-5, rtol=1e-5)

    # 3) SoA entry point (producer already emits (3, N); no transpose pass).
    pts3_soa = jnp.transpose(jax.random.normal(k3, (4096, 3), dtype=jnp.float32))
    out3 = jax.block_until_ready(torus_sdf_from_soa(pts3_soa, center, radii))
    ref3 = torus_sdf_ref(pts3_soa.T, center, radii)
    assert out3.shape == (4096, 1)
    assert jnp.allclose(out3, ref3, atol=1e-5, rtol=1e-5)

    # 4) Tiny point cloud -> pure-jnp fast path (same semantics).
    points4 = jax.random.normal(jax.random.PRNGKey(1), (2, 10, 3),
                                dtype=jnp.float32)
    out4 = jax.block_until_ready(torus_sdf(points4, center, radii))
    ref4 = torus_sdf_ref(points4, center, radii)
    assert out4.shape == (20, 1)
    assert jnp.allclose(out4, ref4, atol=1e-5, rtol=1e-5)

    print("KERNEL_OK")
</pallas_src>

<mosaic_0001>
module attributes {stable_mosaic.version = 11 : i64} {
  func.func @torus_sdf_kernel(%arg0: i32, %arg1: memref<3xf32, #tpu.memory_space<smem>>, %arg2: memref<2xf32, #tpu.memory_space<smem>>, %arg3: memref<3x16x128xf32, #tpu.memory_space<vmem>>, %arg4: memref<16x128xf32, #tpu.memory_space<vmem>>) attributes {dimension_semantics = [#tpu.dimension_semantics<parallel>], iteration_bounds = array<i64: 4>, scalar_prefetch = 0 : i64, scratch_operands = 0 : i64, tpu.core_type = #tpu.core_type<tc>, window_params = [{transform_indices = @transform_0, window_bounds = array<i64: 3>}, {transform_indices = @transform_1, window_bounds = array<i64: 2>}, {transform_indices = @transform_2, window_bounds = array<i64: 3, 16, 128>}, {transform_indices = @transform_3, window_bounds = array<i64: 16, 128>}]} {
    %c0 = arith.constant 0 : index
    %0 = memref.load %arg1[%c0] : memref<3xf32, #tpu.memory_space<smem>>
    %c1 = arith.constant 1 : index
    %1 = memref.load %arg1[%c1] : memref<3xf32, #tpu.memory_space<smem>>
    %c2 = arith.constant 2 : index
    %2 = memref.load %arg1[%c2] : memref<3xf32, #tpu.memory_space<smem>>
    %c0_0 = arith.constant 0 : index
    %3 = memref.load %arg2[%c0_0] : memref<2xf32, #tpu.memory_space<smem>>
    %c1_1 = arith.constant 1 : index
    %4 = memref.load %arg2[%c1_1] : memref<2xf32, #tpu.memory_space<smem>>
    %c0_2 = arith.constant 0 : index
    %c0_3 = arith.constant 0 : index
    %c0_4 = arith.constant 0 : index
    %5 = vector.load %arg3[%c0_2, %c0_3, %c0_4] : memref<3x16x128xf32, #tpu.memory_space<vmem>>, vector<1x16x128xf32>
    %6 = vector.shape_cast %5 : vector<1x16x128xf32> to vector<16x128xf32>
    %7 = vector.broadcast %0 : f32 to vector<16x128xf32>
    %8 = arith.subf %6, %7 : vector<16x128xf32>
    %c1_5 = arith.constant 1 : index
    %c0_6 = arith.constant 0 : index
    %c0_7 = arith.constant 0 : index
    %9 = vector.load %arg3[%c1_5, %c0_6, %c0_7] : memref<3x16x128xf32, #tpu.memory_space<vmem>>, vector<1x16x128xf32>
    %10 = vector.shape_cast %9 : vector<1x16x128xf32> to vector<16x128xf32>
    %11 = vector.broadcast %1 : f32 to vector<16x128xf32>
    %12 = arith.subf %10, %11 : vector<16x128xf32>
    %c2_8 = arith.constant 2 : index
    %c0_9 = arith.constant 0 : index
    %c0_10 = arith.constant 0 : index
    %13 = vector.load %arg3[%c2_8, %c0_9, %c0_10] : memref<3x16x128xf32, #tpu.memory_space<vmem>>, vector<1x16x128xf32>
    %14 = vector.shape_cast %13 : vector<1x16x128xf32> to vector<16x128xf32>
    %15 = vector.broadcast %2 : f32 to vector<16x128xf32>
    %16 = arith.subf %14, %15 : vector<16x128xf32>
    %17 = arith.mulf %8, %8 : vector<16x128xf32>
    %18 = arith.mulf %12, %12 : vector<16x128xf32>
    %19 = arith.addf %17, %18 : vector<16x128xf32>
    %20 = math.sqrt %19 : vector<16x128xf32>
    %21 = vector.broadcast %3 : f32 to vector<16x128xf32>
    %22 = arith.subf %20, %21 : vector<16x128xf32>
    %23 = arith.mulf %22, %22 : vector<16x128xf32>
    %24 = arith.mulf %16, %16 : vector<16x128xf32>
    %25 = arith.addf %23, %24 : vector<16x128xf32>
    %26 = math.sqrt %25 : vector<16x128xf32>
    %27 = vector.broadcast %4 : f32 to vector<16x128xf32>
    %28 = arith.subf %26, %27 : vector<16x128xf32>
    %c0_11 = arith.constant 0 : index
    %c0_12 = arith.constant 0 : index
    %29 = vector.load %arg4[%c0_11, %c0_12] : memref<16x128xf32, #tpu.memory_space<vmem>>, vector<16x128xf32>
    tpu.vector_store %arg4[%c0_11, %c0_12], %28 {strides = array<i32>} : memref<16x128xf32, #tpu.memory_space<vmem>>, vector<16x128xf32>,
    return
  }
  func.func @transform_0(%arg0: i32) -> i32 {
    %c0_i32 = arith.constant 0 : i32
    %c0_i32_0 = arith.constant 0 : i32
    return %c0_i32 : i32
  }
  func.func @transform_1(%arg0: i32) -> i32 {
    %c0_i32 = arith.constant 0 : i32
    %c0_i32_0 = arith.constant 0 : i32
    return %c0_i32 : i32
  }
  func.func @transform_2(%arg0: i32) -> (i32, i32, i32) {
    %c0_i32 = arith.constant 0 : i32
    %c0_i32_0 = arith.constant 0 : i32
    %c0_i32_1 = arith.constant 0 : i32
    return %c0_i32, %arg0, %c0_i32_0 : i32, i32, i32
  }
  func.func @transform_3(%arg0: i32) -> (i32, i32) {
    %c0_i32 = arith.constant 0 : i32
    %c0_i32_0 = arith.constant 0 : i32
    return %arg0, %c0_i32 : i32, i32
  }
}

</mosaic_0001>

<llo_original>
// kernel: tpu_custom_call.1
$region0: #{tpu_custom_call.1}
  #allocation0 [shape = 'u32[]', space=smem, size = 0x4, offset = 0x4, fixed_abs, tag = 'smem constant byte address 0x4 - core index']
  #allocation1 [shape = 'u32[144,128]{1,0:T(1,128)}', space=vmem, size = 0x12000, scoped, tag = 'internal scratch']
  #allocation10 [shape = 's32[]', space=sflag, size = 0x4, offset = 0, fixed_abs, tag = 'sflag constant byte address 0x0 - dummy sync flag']
  %s0 = inlined_call_operand.hbm [shape: f32[3], index: 0, kind: input, shape index: {}]
  %s1 = inlined_call_operand.vmem [shape: f32[2], index: 1, kind: input, shape index: {}]
  %s2 = inlined_call_operand.hbm [shape: f32[3,64,128], index: 2, kind: input, shape index: {}]
  %s3 = inlined_call_operand.hbm [shape: f32[64,128], index: 3, kind: output, shape index: {}]
  %s4 = sld [smem:[#allocation0]]
  $region57: #{tpu_custom_call.1} parent=0
    _
  %s6 = ssub.s32 1, %s4
  %s7 = scalar_select 0, %s6, %s4
  $region1: #{tpu_custom_call.1} parent=0
    #allocation2 [shape = 'u8[512]{0}', space=smem, size = 0x200, scoped, tag = 'input window, operand 0, single buffered']
    #allocation3 [shape = 's32[2]{0}', space=sflag, size = 0x8, scoped, tag = 'scoped memory for tpu_custom_call.1']
    #allocation4 [shape = 's32[2]{0}', space=sflag, size = 0x8, scoped, tag = 'scoped memory for tpu_custom_call.1']
    #allocation5 [shape = 's32[2]{0}', space=sflag, size = 0x8, scoped, tag = 'scoped memory for tpu_custom_call.1']
    #allocation6 [shape = 's32[2]{0}', space=sflag, size = 0x8, scoped, tag = 'scoped memory for tpu_custom_call.1']
    #allocation7 [shape = 'u8[512]{0}', space=smem, size = 0x200, scoped, tag = 'input window, operand 1, single buffered']
    #allocation8 [shape = 'u8[49152]{0}', space=vmem, size = 0xc000, scoped, tag = 'input window, operand 2']
    #allocation9 [shape = 'u8[16384]{0}', space=vmem, size = 0x4000, scoped, tag = 'output window, operand 0']
    %8 = vsyncpa [#allocation5], 0
    %9 = vsyncpa [#allocation6], 0
    %10 = vsyncpa [#allocation3], 0
    %s11 = scalar_lea.sflag [#allocation3], 1
    %12 = vsyncpa %s11, 0
    %13 = vsyncpa [#allocation4], 0
    %s14 = scalar_lea.sflag [#allocation4], 1
    %15 = vsyncpa %s14, 0
    loop: start=0, step=1, limit=6
    $region2: #{tpu_custom_call.1} parent=1 // loop_pre_header
      _
    $region3: #{tpu_custom_call.1} parent=1 // loop_header
      %s17 = sphi 0, %s21
      %p18 = scmp.ge.s32.totalorder %s17, 6
      %s25 = sphi 0, %s25
      %s27 = sphi 0, %s25
      %s28 = sphi 0, %s27
      %s42 = sphi 0, %s28
      %s46 = sphi 0, %s46
      %s48 = sphi 0, %s46
      %s49 = sphi 0, %s48
      %s63 = sphi 0, %s49
      %s69 = sphi 0, %s71
      %s72 = sphi 0, %s69
      %s73 = sphi 0, %s72
      %s89 = sphi 0, %s73
      %s95 = sphi 0, %s97
      %s98 = sphi 0, %s95
      %s99 = sphi 0, %s98
      %s115 = sphi 0, %s99
    $region4: #{tpu_custom_call.1} parent=1 // loop_header_branch
      %20 = sbr.rel (%p18) target = $region8
    $region5: #{tpu_custom_call.1} parent=1 // loop_body
      %s22 = ssub.s32 %s17, 1
      %s23 = ssub.s32 %s17, 2
      %s24 = sadd.s32 %s17, 1
      %s26 = sadd.s32 %s25, 1
      %p29 = scmp.eq.s32.totalorder %s17, 3
      %p30 = scmp.ne.s32.totalorder %s25, %s27
      %p31 = scmp.eq.s32.totalorder %s17, 0
      %p32 = por %p30, %p31
      %p33 = scmp.ne.s32.totalorder %s25, %s27
      %p34 = scmp.eq.s32.totalorder %s22, 3
      %p35 = por %p33, %p34
      %p36 = scmp.ne.s32.totalorder %s27, %s28
      %p37 = scmp.eq.s32.totalorder %s22, 0
      %p38 = por %p36, %p37
      %p39 = scmp.ne.s32.totalorder %s27, %s28
      %p40 = scmp.eq.s32.totalorder %s23, 3
      %p41 = por %p39, %p40
      %p43 = scmp.ne.s32.totalorder %s28, %s42
      %p44 = scmp.eq.s32.totalorder %s23, 0
      %p45 = por %p43, %p44
      %s47 = sadd.s32 %s46, 1
      %p50 = scmp.eq.s32.totalorder %s17, 3
      %p51 = scmp.ne.s32.totalorder %s46, %s48
      %p52 = scmp.eq.s32.totalorder %s17, 0
      %p53 = por %p51, %p52
      %p54 = scmp.ne.s32.totalorder %s46, %s48
      %p55 = scmp.eq.s32.totalorder %s22, 3
      %p56 = por %p54, %p55
      %p57 = scmp.ne.s32.totalorder %s48, %s49
      %p58 = scmp.eq.s32.totalorder %s22, 0
      %p59 = por %p57, %p58
      %p60 = scmp.ne.s32.totalorder %s48, %s49
      %p61 = scmp.eq.s32.totalorder %s23, 3
      %p62 = por %p60, %p61
      %p64 = scmp.ne.s32.totalorder %s49, %s63
      %p65 = scmp.eq.s32.totalorder %s23, 0
      %p66 = por %p64, %p65
      %s67 = ssub.s32 %s17, %s24
      %p68 = scmp.eq.s32.totalorder %s67, 0
      %s70 = sadd.s32 %s69, 1
      %s71 = scalar_select %p68, %s69, %s70
      %p74 = pneg %p68
      %p75 = scmp.eq.s32.totalorder %s17, 3
      %p76 = por %p74, %p75
      %p77 = scmp.ne.s32.totalorder %s69, %s72
      %p78 = scmp.eq.s32.totalorder %s17, 0
      %p79 = por %p77, %p78
      %p80 = scmp.ne.s32.totalorder %s69, %s72
      %p81 = scmp.eq.s32.totalorder %s22, 3
      %p82 = por %p80, %p81
      %p83 = scmp.ne.s32.totalorder %s72, %s73
      %p84 = scmp.eq.s32.totalorder %s22, 0
      %p85 = por %p83, %p84
      %p86 = scmp.ne.s32.totalorder %s72, %s73
      %p87 = scmp.eq.s32.totalorder %s23, 3
      %p88 = por %p86, %p87
      %p90 = scmp.ne.s32.totalorder %s73, %s89
      %p91 = scmp.eq.s32.totalorder %s23, 0
      %p92 = por %p90, %p91
      %s93 = ssub.s32 %s17, %s24
      %p94 = scmp.eq.s32.totalorder %s93, 0
      %s96 = sadd.s32 %s95, 1
      %s97 = scalar_select %p94, %s95, %s96
      %p100 = pneg %p94
      %p101 = scmp.eq.s32.totalorder %s17, 3
      %p102 = por %p100, %p101
      %p103 = scmp.ne.s32.totalorder %s95, %s98
      %p104 = scmp.eq.s32.totalorder %s17, 0
      %p105 = por %p103, %p104
      %p106 = scmp.ne.s32.totalorder %s95, %s98
      %p107 = scmp.eq.s32.totalorder %s22, 3
      %p108 = por %p106, %p107
      %p109 = scmp.ne.s32.totalorder %s98, %s99
      %p110 = scmp.eq.s32.totalorder %s22, 0
      %p111 = por %p109, %p110
      %p112 = scmp.ne.s32.totalorder %s98, %s99
      %p113 = scmp.eq.s32.totalorder %s23, 3
      %p114 = por %p112, %p113
      %p116 = scmp.ne.s32.totalorder %s99, %s115
      %p117 = scmp.eq.s32.totalorder %s23, 0
      %p118 = por %p116, %p117
      %p119 = scmp.le.s32.totalorder 1, %s17
      %p120 = scmp.lt.s32.totalorder %s17, 5
      %p121 = pnand %p119, %p120
      %p122 = pneg %p121
      // Predicated region
      $region9: #{tpu_custom_call.1} parent=5 // pred_check
        _
      $region10: #{tpu_custom_call.1} parent=5 // pred_check_branch
        %124 = sbr.rel (%p121) target = $region12
      $region11: #{tpu_custom_call.1} parent=5 // pred_region
        %s125 = ssub.s32 %s17, 1
        // Predicated region
        $region13: #{tpu_custom_call.1} parent=11 // pred_check
          %p126 = pneg %p38
        $region14: #{tpu_custom_call.1} parent=11 // pred_check_branch
          %128 = sbr.rel (%p126) target = $region16
        $region15: #{tpu_custom_call.1} parent=11 // pred_region
          %s130 = ssub.s32 16, 16
          %131 = vsyncadd [#allocation5], %s130
          %134 = dma.hbm_to_smem %s0, 16, [#allocation2], [#allocation5]
        $region16: #{tpu_custom_call.1} parent=11 // pred_fallthru
          _
        // Predicated region
        $region17: #{tpu_custom_call.1} parent=11 // pred_check
          %p135 = pneg %p59
        $region18: #{tpu_custom_call.1} parent=11 // pred_check_branch
          %137 = sbr.rel (%p135) target = $region20
        $region19: #{tpu_custom_call.1} parent=11 // pred_region
          %s139 = ssub.s32 16, 16
          %140 = vsyncadd [#allocation6], %s139
          %s142 = sshll.u32 %s1, 4
          %s143 = int_to_ptr.vmem [resolvable:$true] %s142
          %145 = dma.vmem_to_smem %s143, 16, [#allocation7], [#allocation6]
        $region20: #{tpu_custom_call.1} parent=11 // pred_fallthru
          _
      $region12: #{tpu_custom_call.1} parent=5 // pred_fallthru
        _
      %p146 = scmp.lt.s32.totalorder %s17, 4
      // Predicated region
      $region21: #{tpu_custom_call.1} parent=5 // pred_check
        %p147 = pneg %p146
      $region22: #{tpu_custom_call.1} parent=5 // pred_check_branch
        %149 = sbr.rel (%p147) target = $region24
      $region23: #{tpu_custom_call.1} parent=5 // pred_region
        // Predicated region
        $region25: #{tpu_custom_call.1} parent=23 // pred_check
          %p150 = pneg %p79
        $region26: #{tpu_custom_call.1} parent=23 // pred_check_branch
          %152 = sbr.rel (%p150) target = $region28
        $region27: #{tpu_custom_call.1} parent=23 // pred_region
          #allocation11 [shape = 'u32[6]{0}', space=smem, size = 0x18, scoped, tag = 'DMA stride descriptor']
          %s153 = sand.u32 %s69, 1
          %s154 = scalar_lea.sflag [#allocation3], %s153
          %s155 = sand.u32 %s69, 1
          %s156 = smul.addr %s155, 48
          %s157 = scalar_lea.vmem [#allocation8], %s156
          %s158 = smul.u32 2, %s17
          %s160 = ssub.s32 768, 768
          %161 = vsyncadd %s154, %s160
          %s162 = smul.addr %s158, 128
          %s163 = scalar_lea.hbm %s2, %s162
          %s165 = sshll.u32 1, 14
          %s166 = sxor.u32 4294967295, %s165
          %s168 = sld [smem:[#allocation0]]
          %s169 = sadd.s32 2, %s168
          %s171 = sshll.u32 7, 26
          %s172 = sxor.u32 4294967295, %s171
          %s173 = sand.u32 0, %s172
          %s174 = sshll.u32 %s169, 26
          %s175 = sor.u32 %s173, %s174
          %s176 = sshll.u32 %s157, 4
          %s177 = int_to_ptr.vmem [resolvable:$true] %s176
          %183 = sst [smem:[#allocation11]] 1024
          %s184 = scalar_lea.smem [#allocation11], 1
          %185 = sst [smem:[%s184]] 256
          %s186 = scalar_lea.smem [#allocation11], 2
          %187 = sst [smem:[%s186]] 2
          %s188 = scalar_lea.smem [#allocation11], 3
          %189 = sst [smem:[%s188]] 128
          %s190 = scalar_lea.smem [#allocation11], 4
          %191 = sst [smem:[%s190]] 128
          %s192 = scalar_lea.smem [#allocation11], 5
          %193 = sst [smem:[%s192]] 8
          %195 = dma.general %s163, 768, %s177, %s154, [#allocation10], [#allocation11], %s175, 0
        $region28: #{tpu_custom_call.1} parent=23 // pred_fallthru
          _
      $region24: #{tpu_custom_call.1} parent=5 // pred_fallthru
        _
      %p196 = scmp.le.s32.totalorder 1, %s17
      %p197 = scmp.lt.s32.totalorder %s17, 5
      %p198 = pnand %p196, %p197
      %p199 = pneg %p198
      // Predicated region
      $region29: #{tpu_custom_call.1} parent=5 // pred_check
        _
      $region30: #{tpu_custom_call.1} parent=5 // pred_check_branch
        %201 = sbr.rel (%p198) target = $region32
      $region31: #{tpu_custom_call.1} parent=5 // pred_region
        %s202 = ssub.s32 %s17, 1
        // Predicated region
        $region33: #{tpu_custom_call.1} parent=31 // pred_check
          %p203 = pneg %p38
        $region34: #{tpu_custom_call.1} parent=31 // pred_check_branch
          %205 = sbr.rel (%p203) target = $region36
        $region35: #{tpu_custom_call.1} parent=31 // pred_region
          %206 = dma.done [#allocation5], 16
        $region36: #{tpu_custom_call.1} parent=31 // pred_fallthru
          _
        // Predicated region
        $region37: #{tpu_custom_call.1} parent=31 // pred_check
          %p207 = pneg %p59
        $region38: #{tpu_custom_call.1} parent=31 // pred_check_branch
          %209 = sbr.rel (%p207) target = $region40
        $region39: #{tpu_custom_call.1} parent=31 // pred_region
          %210 = dma.done [#allocation6], 16
        $region40: #{tpu_custom_call.1} parent=31 // pred_fallthru
          _
        %s211 = sand.u32 %s72, 1
        %s212 = scalar_lea.sflag [#allocation3], %s211
        %s213 = sand.u32 %s72, 1
        %s214 = smul.addr %s213, 48
        %s215 = scalar_lea.vmem [#allocation8], %s214
        // Predicated region
        $region41: #{tpu_custom_call.1} parent=31 // pred_check
          %p216 = pneg %p85
        $region42: #{tpu_custom_call.1} parent=31 // pred_check_branch
          %218 = sbr.rel (%p216) target = $region44
        $region43: #{tpu_custom_call.1} parent=31 // pred_region
          %219 = dma.done %s212, 768
        $region44: #{tpu_custom_call.1} parent=31 // pred_fallthru
          _
        %220 = sfence
        %p221 = pneg %p38
        %p222 = pneg %p35
        %p223 = pneg %p59
        %p224 = pneg %p56
        %s225 = sand.u32 %s72, 1
        %s226 = scalar_lea.sflag [#allocation3], %s225
        %s227 = sand.u32 %s72, 1
        %s228 = smul.addr %s227, 48
        %s229 = scalar_lea.vmem [#allocation8], %s228
        %p230 = pneg %p85
        %p231 = pneg %p82
        %p232 = pneg %p111
        %p233 = pneg %p108
        %s234 = sand.u32 %s98, 1
        %s235 = scalar_lea.sflag [#allocation4], %s234
        %s236 = sand.u32 %s98, 1
        %s237 = smul.addr %s236, 16
        %s238 = scalar_lea.vmem [#allocation9], %s237
        %s239 = smul.u32 2, %s22
        %s240 = smul.u32 2, %s22
        %s241 = sld [smem:[#allocation2]]
        %s242 = sld [smem:[#allocation2 + $0x1]]
        %s243 = sld [smem:[#allocation2 + $0x2]]
        %s244 = sld [smem:[#allocation7]]
        %s245 = sld [smem:[#allocation7 + $0x1]]
        %v246 = vld [vmem:[%s215] sm:$0xff]
        %v247 = vld [vmem:[%s215 + $0x8] sm:$0xff]
        %v248 = vstv %s241
        %v249 = vsub.f32 %v246, %v248
        %v250 = vsub.f32 %v247, %v248
        %s251 = scalar_lea.vmem %s215, 16 [#allocation8]
        %v252 = vld [vmem:[%s251] sm:$0xff]
        %v253 = vld [vmem:[%s251 + $0x8] sm:$0xff]
        %v254 = vstv %s242
        %v255 = vsub.f32 %v252, %v254
        %v256 = vsub.f32 %v253, %v254
        %s257 = scalar_lea.vmem %s215, 32 [#allocation8]
        %v258 = vld [vmem:[%s257] sm:$0xff]
        %v259 = vld [vmem:[%s257 + $0x8] sm:$0xff]
        %v260 = vstv %s243
        %v261 = vsub.f32 %v258, %v260
        %v262 = vsub.f32 %v259, %v260
        %v263 = vmul.f32 %v249, %v249
        %v264 = vmul.f32 %v250, %v250
        %v265 = vmul.f32 %v255, %v255
        %v266 = vmul.f32 %v256, %v256
        %v267 = vadd.f32 %v263, %v265
        %v268 = vadd.f32 %v264, %v266
        %v269 = vrsqrt.pop %v267
        %v270 = vmul.f32 %v267, %v269
        %vm271 = vcmp.eq.f32.partialorder %v267, inf
        %v272 = vsel %vm271, %v267, %v270
        %vm273 = vcmp.eq.f32.partialorder %v267, 0.0
        %v274 = vand.u32 %v267, 2147483648
        %v275 = vsel %vm273, %v274, %v272
        %v276 = vrsqrt.pop %v268
        %v277 = vmul.f32 %v268, %v276
        %vm278 = vcmp.eq.f32.partialorder %v268, inf
        %v279 = vsel %vm278, %v268, %v277
        %vm280 = vcmp.eq.f32.partialorder %v268, 0.0
        %v281 = vand.u32 %v268, 2147483648
        %v282 = vsel %vm280, %v281, %v279
        %v283 = vstv %s244
        %v284 = vsub.f32 %v275, %v283
        %v285 = vsub.f32 %v282, %v283
        %v286 = vmul.f32 %v284, %v284
        %v287 = vmul.f32 %v285, %v285
        %v288 = vmul.f32 %v261, %v261
        %v289 = vmul.f32 %v262, %v262
        %v290 = vadd.f32 %v286, %v288
        %v291 = vadd.f32 %v287, %v289
        %v292 = vrsqrt.pop %v290
        %v293 = vmul.f32 %v290, %v292
        %vm294 = vcmp.eq.f32.partialorder %v290, inf
        %v295 = vsel %vm294, %v290, %v293
        %vm296 = vcmp.eq.f32.partialorder %v290, 0.0
        %v297 = vand.u32 %v290, 2147483648
        %v298 = vsel %vm296, %v297, %v295
        %v299 = vrsqrt.pop %v291
        %v300 = vmul.f32 %v291, %v299
        %vm301 = vcmp.eq.f32.partialorder %v291, inf
        %v302 = vsel %vm301, %v291, %v300
        %vm303 = vcmp.eq.f32.partialorder %v291, 0.0
        %v304 = vand.u32 %v291, 2147483648
        %v305 = vsel %vm303, %v304, %v302
        %v306 = vstv %s245
        %v307 = vsub.f32 %v298, %v306
        %v308 = vsub.f32 %v305, %v306
        %309 = vst [vmem:[%s238] sm:$0xff] %v307
        %310 = vst [vmem:[%s238 + $0x8] sm:$0xff] %v308
        %s311 = sand.u32 %s98, 1
        %s312 = scalar_lea.sflag [#allocation4], %s311
        %s313 = sand.u32 %s98, 1
        %s314 = smul.addr %s313, 16
        %s315 = scalar_lea.vmem [#allocation9], %s314
        // Predicated region
        $region45: #{tpu_custom_call.1} parent=31 // pred_check
          %p316 = pneg %p108
        $region46: #{tpu_custom_call.1} parent=31 // pred_check_branch
          %318 = sbr.rel (%p316) target = $region48
        $region47: #{tpu_custom_call.1} parent=31 // pred_region
          %s319 = smul.u32 2, %s22
          %s321 = ssub.s32 256, 256
          %322 = vsyncadd %s312, %s321
          %s323 = smul.addr %s319, 128
          %s324 = scalar_lea.hbm %s3, %s323
          %s325 = sshll.u32 %s315, 4
          %s326 = int_to_ptr.vmem [resolvable:$true] %s325
          %331 = dma.vmem_to_hbm [thread:$0]  %s326, 256, %s324, %s312, 128, 128, 8
        $region48: #{tpu_custom_call.1} parent=31 // pred_fallthru
          _
      $region32: #{tpu_custom_call.1} parent=5 // pred_fallthru
        _
      %p332 = scmp.le.s32.totalorder 2, %s17
      // Predicated region
      $region49: #{tpu_custom_call.1} parent=5 // pred_check
        %p333 = pneg %p332
      $region50: #{tpu_custom_call.1} parent=5 // pred_check_branch
        %335 = sbr.rel (%p333) target = $region52
      $region51: #{tpu_custom_call.1} parent=5 // pred_region
        %s336 = ssub.s32 %s17, 2
        // Predicated region
        $region53: #{tpu_custom_call.1} parent=51 // pred_check
          %p337 = pneg %p114
        $region54: #{tpu_custom_call.1} parent=51 // pred_check_branch
          %339 = sbr.rel (%p337) target = $region56
        $region55: #{tpu_custom_call.1} parent=51 // pred_region
          %s340 = sand.u32 %s99, 1
          %s341 = scalar_lea.sflag [#allocation4], %s340
          %s342 = sand.u32 %s99, 1
          %s343 = smul.addr %s342, 16
          %s344 = scalar_lea.vmem [#allocation9], %s343
          %345 = dma.done %s341, 256
        $region56: #{tpu_custom_call.1} parent=51 // pred_fallthru
          _
      $region52: #{tpu_custom_call.1} parent=5 // pred_fallthru
        _
    $region6: #{tpu_custom_call.1} parent=1 // loop_footer
      %s21 = sadd.s32 1, %s17
    $region7: #{tpu_custom_call.1} parent=1 // loop_footer_branch
      %16 = sbr.rel target = $region3
    $region8: #{tpu_custom_call.1} parent=1 // loop_exit
      _
    %346 = vsyncpa [#allocation3], 1
    %s347 = scalar_lea.sflag [#allocation3], 1
    %348 = vsyncpa %s347, 1
    %349 = vsyncpa [#allocation4], 1
    %s350 = scalar_lea.sflag [#allocation4], 1
    %351 = vsyncpa %s350, 1
    %352 = vsyncpa [#allocation5], 1
    %s353 = scalar_lea.sflag [#allocation5], 1
    %354 = vsyncpa %s353, 1
    %355 = vsyncpa [#allocation6], 1
    %s356 = scalar_lea.sflag [#allocation6], 1
    %357 = vsyncpa %s356, 1

</llo_original>
